<compile_context>
chip_gen: v7x
topology: tpu7x:2x2x1
jax: 0.10.0
libtpu: 0.0.40
codegen_flags: <defaults>
</compile_context>

<pallas_src>
import functools
from typing import List, Sequence, Tuple

import jax
import jax.numpy as jnp
from jax.experimental import pallas as pl
from jax.experimental.pallas import tpu as pltpu


# ---------------------------------------------------------------------------
# Fused kernel: the entire encoder + decoder in one body
# ---------------------------------------------------------------------------
def _fused_ae_kernel(*refs, relu_flags: Tuple[bool, ...]):
    # refs = (x_ref, w0, b0, w1, b1, ..., w_{L-1}, b_{L-1}, o_ref)
    x_ref = refs[0]
    o_ref = refs[-1]
    h = x_ref[...].astype(jnp.float32)
    for li, relu in enumerate(relu_flags):
        w = refs[1 + 2 * li][...]        # (In, Out)
        b = refs[2 + 2 * li][...]        # (1, Out) -> broadcasts over rows
        h = jnp.dot(h, w, preferred_element_type=jnp.float32) + b
        if relu:
            h = jnp.maximum(h, 0.0)
    o_ref[...] = h.astype(o_ref.dtype)


def autoencoder_forward_fused(x, params, relu_flags, *, batch_tile: int = 512):
    """Full forward pass (encoder -> decoder) in a single Pallas kernel.

    params: list of (w_t, b2) with w_t (In, Out) and b2 (1, Out), in forward
            order (encoder layers then decoder layers).
    relu_flags: per-layer bool, True => ReLU after that Linear.
    """
    B, d_in = x.shape
    d_out = params[-1][0].shape[1]
    assert len(params) == len(relu_flags)

    # Batch tile: a multiple of 8 (f32 sublane), capped at `batch_tile`.
    if B <= batch_tile:
        tb = B
    else:
        tb = batch_tile
        assert B % tb == 0, "large batches must be a multiple of batch_tile"
    grid = (B // tb,)

    in_specs = [pl.BlockSpec((tb, d_in), lambda i: (i, 0))]
    inputs = [x]
    for w_t, b2 in params:
        fin, fout = w_t.shape
        # Weights/biases: full-array blocks, constant index_map -> VMEM-resident
        # across the batch grid.
        in_specs.append(pl.BlockSpec((fin, fout), lambda i: (0, 0)))
        in_specs.append(pl.BlockSpec((1, fout), lambda i: (0, 0)))
        inputs.extend([w_t, b2])

    # Explicit VMEM budget: double-buffered activation blocks + params + slack.
    param_bytes = sum(
        int(w.size) * w.dtype.itemsize + int(b.size) * b.dtype.itemsize
        for (w, b) in params
    )
    act_bytes = tb * (d_in + d_out) * x.dtype.itemsize
    vmem_needed = 2 * act_bytes + 2 * param_bytes + (2 << 20)
    vmem_limit = int(min(64 << 20, max(vmem_needed, 8 << 20)))

    kernel = functools.partial(_fused_ae_kernel, relu_flags=tuple(relu_flags))
    return pl.pallas_call(
        kernel,
        out_shape=jax.ShapeDtypeStruct((B, d_out), x.dtype),
        grid=grid,
        in_specs=in_specs,
        out_specs=pl.BlockSpec((tb, d_out), lambda i: (i, 0)),
        compiler_params=pltpu.CompilerParams(
            dimension_semantics=("parallel",),   # shards batch tiles on v7x's 2 TCs
            vmem_limit_bytes=vmem_limit,
        ),
    )(*inputs)


# ---------------------------------------------------------------------------
# Parameter construction matching the PyTorch module's layer structure
# ---------------------------------------------------------------------------
def build_autoencoder(key, dimensions: List[int]):
    """Returns (params, relu_flags) for the fused forward pass.

    Encoder: Linear(d[i] -> d[i+1]), ReLU after each except the last (bottleneck).
    Decoder: Linear(d[i+1] -> d[i]) applied from i = n-2 down to 0,
             ReLU after each except the very last Linear(d[1] -> d[0]).
    Weights stored transposed (in, out); biases stored as (1, out).
    """
    n = len(dimensions)
    layer_dims = []
    relu_flags = []
    for i in range(n - 1):                       # encoder
        layer_dims.append((dimensions[i], dimensions[i + 1]))
        relu_flags.append(i < n - 2)             # no ReLU after bottleneck
    for i in range(n - 2, -1, -1):               # decoder (reversed)
        layer_dims.append((dimensions[i + 1], dimensions[i]))
        relu_flags.append(i > 0)                 # no ReLU after final layer

    params = []
    for fan_in, fan_out in layer_dims:
        key, kw, kb = jax.random.split(key, 3)
        bound = 1.0 / jnp.sqrt(fan_in)
        w_t = jax.random.uniform(kw, (fan_in, fan_out), jnp.float32, -bound, bound)
        b2 = jax.random.uniform(kb, (1, fan_out), jnp.float32, -bound, bound)
        params.append((w_t, b2))
    return params, tuple(relu_flags)


def autoencoder_forward_ref(x, params, relu_flags):
    """Pure-JAX reference for correctness checking."""
    h = x
    for (w_t, b2), relu in zip(params, relu_flags):
        h = h @ w_t + b2
        if relu:
            h = jnp.maximum(h, 0.0)
    return h


if __name__ == "__main__":
    dimensions = [64, 32, 16]   # d0 -> d1 -> d2 (bottleneck), then back to d0
    batch = 8

    key = jax.random.PRNGKey(0)
    key, kx, kp = jax.random.split(key, 3)
    x = jax.random.normal(kx, (batch, dimensions[0]), jnp.float32)
    params, relu_flags = build_autoencoder(kp, dimensions)

    out = autoencoder_forward_fused(x, params, relu_flags)
    out = jax.block_until_ready(out)

    ref = autoencoder_forward_ref(x, params, relu_flags)
    assert out.shape == (batch, dimensions[0])
    assert jnp.allclose(out, ref, atol=1e-5, rtol=1e-5), "mismatch vs JAX reference"

    print("KERNEL_OK")
</pallas_src>

<mosaic_0001>
module attributes {stable_mosaic.version = 11 : i64} {
  func.func @_fused_ae_kernel(%arg0: i32, %arg1: memref<8x64xf32, #tpu.memory_space<vmem>>, %arg2: memref<64x32xf32, #tpu.memory_space<vmem>>, %arg3: memref<1x32xf32, #tpu.memory_space<vmem>>, %arg4: memref<32x16xf32, #tpu.memory_space<vmem>>, %arg5: memref<1x16xf32, #tpu.memory_space<vmem>>, %arg6: memref<16x32xf32, #tpu.memory_space<vmem>>, %arg7: memref<1x32xf32, #tpu.memory_space<vmem>>, %arg8: memref<32x64xf32, #tpu.memory_space<vmem>>, %arg9: memref<1x64xf32, #tpu.memory_space<vmem>>, %arg10: memref<8x64xf32, #tpu.memory_space<vmem>>) attributes {dimension_semantics = [#tpu.dimension_semantics<parallel>], iteration_bounds = array<i64: 1>, scalar_prefetch = 0 : i64, scratch_operands = 0 : i64, tpu.core_type = #tpu.core_type<tc>, window_params = [{transform_indices = @transform_0, window_bounds = array<i64: 8, 64>}, {pipeline_mode = #tpu.pipeline_mode<synchronous>, transform_indices = @transform_1, window_bounds = array<i64: 64, 32>}, {pipeline_mode = #tpu.pipeline_mode<synchronous>, transform_indices = @transform_2, window_bounds = array<i64: 1, 32>}, {pipeline_mode = #tpu.pipeline_mode<synchronous>, transform_indices = @transform_3, window_bounds = array<i64: 32, 16>}, {pipeline_mode = #tpu.pipeline_mode<synchronous>, transform_indices = @transform_4, window_bounds = array<i64: 1, 16>}, {pipeline_mode = #tpu.pipeline_mode<synchronous>, transform_indices = @transform_5, window_bounds = array<i64: 16, 32>}, {pipeline_mode = #tpu.pipeline_mode<synchronous>, transform_indices = @transform_6, window_bounds = array<i64: 1, 32>}, {pipeline_mode = #tpu.pipeline_mode<synchronous>, transform_indices = @transform_7, window_bounds = array<i64: 32, 64>}, {pipeline_mode = #tpu.pipeline_mode<synchronous>, transform_indices = @transform_8, window_bounds = array<i64: 1, 64>}, {transform_indices = @transform_9, window_bounds = array<i64: 8, 64>}]} {
    %c0 = arith.constant 0 : index
    %c0_0 = arith.constant 0 : index
    %0 = vector.load %arg1[%c0, %c0_0] : memref<8x64xf32, #tpu.memory_space<vmem>>, vector<8x64xf32>
    %c0_1 = arith.constant 0 : index
    %c0_2 = arith.constant 0 : index
    %1 = vector.load %arg2[%c0_1, %c0_2] : memref<64x32xf32, #tpu.memory_space<vmem>>, vector<64x32xf32>
    %c0_3 = arith.constant 0 : index
    %c0_4 = arith.constant 0 : index
    %2 = vector.load %arg3[%c0_3, %c0_4] : memref<1x32xf32, #tpu.memory_space<vmem>>, vector<1x32xf32>
    %cst = arith.constant dense<0.000000e+00> : vector<8x32xf32>
    %3 = tpu.matmul %0, %1, %cst {dimension_numbers = #tpu.dot_dimension_numbers<[1], [0], [0], [1], [0, 0, 1, 1], [], []>} : vector<8x64xf32>, vector<64x32xf32>, vector<8x32xf32> -> vector<8x32xf32>
    %4 = vector.broadcast %2 : vector<1x32xf32> to vector<8x32xf32>
    %5 = arith.addf %3, %4 : vector<8x32xf32>
    %cst_5 = arith.constant 0.000000e+00 : f32
    %6 = vector.broadcast %cst_5 : f32 to vector<8x32xf32>
    %7 = arith.maximumf %5, %6 : vector<8x32xf32>
    %c0_6 = arith.constant 0 : index
    %c0_7 = arith.constant 0 : index
    %8 = vector.load %arg4[%c0_6, %c0_7] : memref<32x16xf32, #tpu.memory_space<vmem>>, vector<32x16xf32>
    %c0_8 = arith.constant 0 : index
    %c0_9 = arith.constant 0 : index
    %9 = vector.load %arg5[%c0_8, %c0_9] : memref<1x16xf32, #tpu.memory_space<vmem>>, vector<1x16xf32>
    %cst_10 = arith.constant dense<0.000000e+00> : vector<8x16xf32>
    %10 = tpu.matmul %7, %8, %cst_10 {dimension_numbers = #tpu.dot_dimension_numbers<[1], [0], [0], [1], [0, 0, 1, 1], [], []>} : vector<8x32xf32>, vector<32x16xf32>, vector<8x16xf32> -> vector<8x16xf32>
    %11 = vector.broadcast %9 : vector<1x16xf32> to vector<8x16xf32>
    %12 = arith.addf %10, %11 : vector<8x16xf32>
    %c0_11 = arith.constant 0 : index
    %c0_12 = arith.constant 0 : index
    %13 = vector.load %arg6[%c0_11, %c0_12] : memref<16x32xf32, #tpu.memory_space<vmem>>, vector<16x32xf32>
    %c0_13 = arith.constant 0 : index
    %c0_14 = arith.constant 0 : index
    %14 = vector.load %arg7[%c0_13, %c0_14] : memref<1x32xf32, #tpu.memory_space<vmem>>, vector<1x32xf32>
    %cst_15 = arith.constant dense<0.000000e+00> : vector<8x32xf32>
    %15 = tpu.matmul %12, %13, %cst_15 {dimension_numbers = #tpu.dot_dimension_numbers<[1], [0], [0], [1], [0, 0, 1, 1], [], []>} : vector<8x16xf32>, vector<16x32xf32>, vector<8x32xf32> -> vector<8x32xf32>
    %16 = vector.broadcast %14 : vector<1x32xf32> to vector<8x32xf32>
    %17 = arith.addf %15, %16 : vector<8x32xf32>
    %cst_16 = arith.constant 0.000000e+00 : f32
    %18 = vector.broadcast %cst_16 : f32 to vector<8x32xf32>
    %19 = arith.maximumf %17, %18 : vector<8x32xf32>
    %c0_17 = arith.constant 0 : index
    %c0_18 = arith.constant 0 : index
    %20 = vector.load %arg8[%c0_17, %c0_18] : memref<32x64xf32, #tpu.memory_space<vmem>>, vector<32x64xf32>
    %c0_19 = arith.constant 0 : index
    %c0_20 = arith.constant 0 : index
    %21 = vector.load %arg9[%c0_19, %c0_20] : memref<1x64xf32, #tpu.memory_space<vmem>>, vector<1x64xf32>
    %cst_21 = arith.constant dense<0.000000e+00> : vector<8x64xf32>
    %22 = tpu.matmul %19, %20, %cst_21 {dimension_numbers = #tpu.dot_dimension_numbers<[1], [0], [0], [1], [0, 0, 1, 1], [], []>} : vector<8x32xf32>, vector<32x64xf32>, vector<8x64xf32> -> vector<8x64xf32>
    %23 = vector.broadcast %21 : vector<1x64xf32> to vector<8x64xf32>
    %24 = arith.addf %22, %23 : vector<8x64xf32>
    %c0_22 = arith.constant 0 : index
    %c0_23 = arith.constant 0 : index
    %25 = vector.load %arg10[%c0_22, %c0_23] : memref<8x64xf32, #tpu.memory_space<vmem>>, vector<8x64xf32>
    tpu.vector_store %arg10[%c0_22, %c0_23], %24 {strides = array<i32>} : memref<8x64xf32, #tpu.memory_space<vmem>>, vector<8x64xf32>,
    return
  }
  func.func @transform_0(%arg0: i32) -> (i32, i32) {
    %c0_i32 = arith.constant 0 : i32
    %c0_i32_0 = arith.constant 0 : i32
    return %arg0, %c0_i32 : i32, i32
  }
  func.func @transform_1(%arg0: i32) -> (i32, i32) {
    %c0_i32 = arith.constant 0 : i32
    %c0_i32_0 = arith.constant 0 : i32
    %c0_i32_1 = arith.constant 0 : i32
    return %c0_i32, %c0_i32_0 : i32, i32
  }
  func.func @transform_2(%arg0: i32) -> (i32, i32) {
    %c0_i32 = arith.constant 0 : i32
    %c0_i32_0 = arith.constant 0 : i32
    %c0_i32_1 = arith.constant 0 : i32
    return %c0_i32, %c0_i32_0 : i32, i32
  }
  func.func @transform_3(%arg0: i32) -> (i32, i32) {
    %c0_i32 = arith.constant 0 : i32
    %c0_i32_0 = arith.constant 0 : i32
    %c0_i32_1 = arith.constant 0 : i32
    return %c0_i32, %c0_i32_0 : i32, i32
  }
  func.func @transform_4(%arg0: i32) -> (i32, i32) {
    %c0_i32 = arith.constant 0 : i32
    %c0_i32_0 = arith.constant 0 : i32
    %c0_i32_1 = arith.constant 0 : i32
    return %c0_i32, %c0_i32_0 : i32, i32
  }
  func.func @transform_5(%arg0: i32) -> (i32, i32) {
    %c0_i32 = arith.constant 0 : i32
    %c0_i32_0 = arith.constant 0 : i32
    %c0_i32_1 = arith.constant 0 : i32
    return %c0_i32, %c0_i32_0 : i32, i32
  }
  func.func @transform_6(%arg0: i32) -> (i32, i32) {
    %c0_i32 = arith.constant 0 : i32
    %c0_i32_0 = arith.constant 0 : i32
    %c0_i32_1 = arith.constant 0 : i32
    return %c0_i32, %c0_i32_0 : i32, i32
  }
  func.func @transform_7(%arg0: i32) -> (i32, i32) {
    %c0_i32 = arith.constant 0 : i32
    %c0_i32_0 = arith.constant 0 : i32
    %c0_i32_1 = arith.constant 0 : i32
    return %c0_i32, %c0_i32_0 : i32, i32
  }
  func.func @transform_8(%arg0: i32) -> (i32, i32) {
    %c0_i32 = arith.constant 0 : i32
    %c0_i32_0 = arith.constant 0 : i32
    %c0_i32_1 = arith.constant 0 : i32
    return %c0_i32, %c0_i32_0 : i32, i32
  }
  func.func @transform_9(%arg0: i32) -> (i32, i32) {
    %c0_i32 = arith.constant 0 : i32
    %c0_i32_0 = arith.constant 0 : i32
    return %arg0, %c0_i32 : i32, i32
  }
}

</mosaic_0001>

<llo_original>
// kernel: tpu_custom_call.1
$region0: #{tpu_custom_call.1}
  #allocation0 [shape = 'u32[]', space=smem, size = 0x4, offset = 0x4, fixed_abs, tag = 'smem constant byte address 0x4 - core index']
  #allocation1 [shape = 'u32[144,128]{1,0:T(1,128)}', space=vmem, size = 0x12000, scoped, tag = 'internal scratch']
  %s0 = inlined_call_operand.vmem [shape: f32[8,64], index: 0, kind: input, shape index: {}]
  %s1 = inlined_call_operand.vmem [shape: f32[64,32], index: 1, kind: input, shape index: {}]
  %s2 = inlined_call_operand.vmem [shape: f32[1,32], index: 2, kind: input, shape index: {}]
  %s3 = inlined_call_operand.vmem [shape: f32[32,16], index: 3, kind: input, shape index: {}]
  %s4 = inlined_call_operand.vmem [shape: f32[1,16], index: 4, kind: input, shape index: {}]
  %s5 = inlined_call_operand.vmem [shape: f32[16,32], index: 5, kind: input, shape index: {}]
  %s6 = inlined_call_operand.vmem [shape: f32[1,32], index: 6, kind: input, shape index: {}]
  %s7 = inlined_call_operand.vmem [shape: f32[32,64], index: 7, kind: input, shape index: {}]
  %s8 = inlined_call_operand.vmem [shape: f32[1,64], index: 8, kind: input, shape index: {}]
  %s9 = inlined_call_operand.hbm [shape: f32[8,64], index: 9, kind: output, shape index: {}]
  %s10 = sld [smem:[#allocation0]]
  $region46: #{tpu_custom_call.1} parent=0
    _
  %s12 = ssub.s32 1, %s10
  %s13 = scalar_select 0, %s12, %s10
  $region1: #{tpu_custom_call.1} parent=0
    #allocation2 [shape = 'u8[4096]{0}', space=vmem, size = 0x1000, scoped, tag = 'output window, operand 0, single buffered']
    #allocation3 [shape = 's32[1]{0}', space=sflag, size = 0x4, scoped, tag = 'scoped memory for tpu_custom_call.1']
    %14 = vsyncpa [#allocation3], 0
    // Predicated region
    $region2: #{tpu_custom_call.1} parent=1 // pred_check
      _
    $region3: #{tpu_custom_call.1} parent=1 // pred_check_branch
      %16 = sbr.rel (0) target = $region5
    $region4: #{tpu_custom_call.1} parent=1 // pred_region
      _
    $region5: #{tpu_custom_call.1} parent=1 // pred_fallthru
      _
    // Predicated region
    $region6: #{tpu_custom_call.1} parent=1 // pred_check
      _
    $region7: #{tpu_custom_call.1} parent=1 // pred_check_branch
      %18 = sbr.rel (0) target = $region9
    $region8: #{tpu_custom_call.1} parent=1 // pred_region
      _
    $region9: #{tpu_custom_call.1} parent=1 // pred_fallthru
      _
    // Predicated region
    $region10: #{tpu_custom_call.1} parent=1 // pred_check
      _
    $region11: #{tpu_custom_call.1} parent=1 // pred_check_branch
      %20 = sbr.rel (0) target = $region13
    $region12: #{tpu_custom_call.1} parent=1 // pred_region
      _
    $region13: #{tpu_custom_call.1} parent=1 // pred_fallthru
      _
    // Predicated region
    $region14: #{tpu_custom_call.1} parent=1 // pred_check
      _
    $region15: #{tpu_custom_call.1} parent=1 // pred_check_branch
      %22 = sbr.rel (0) target = $region17
    $region16: #{tpu_custom_call.1} parent=1 // pred_region
      _
    $region17: #{tpu_custom_call.1} parent=1 // pred_fallthru
      _
    // Predicated region
    $region18: #{tpu_custom_call.1} parent=1 // pred_check
      _
    $region19: #{tpu_custom_call.1} parent=1 // pred_check_branch
      %24 = sbr.rel (0) target = $region21
    $region20: #{tpu_custom_call.1} parent=1 // pred_region
      _
    $region21: #{tpu_custom_call.1} parent=1 // pred_fallthru
      _
    // Predicated region
    $region22: #{tpu_custom_call.1} parent=1 // pred_check
      _
    $region23: #{tpu_custom_call.1} parent=1 // pred_check_branch
      %26 = sbr.rel (0) target = $region25
    $region24: #{tpu_custom_call.1} parent=1 // pred_region
      _
    $region25: #{tpu_custom_call.1} parent=1 // pred_fallthru
      _
    // Predicated region
    $region26: #{tpu_custom_call.1} parent=1 // pred_check
      _
    $region27: #{tpu_custom_call.1} parent=1 // pred_check_branch
      %28 = sbr.rel (0) target = $region29
    $region28: #{tpu_custom_call.1} parent=1 // pred_region
      _
    $region29: #{tpu_custom_call.1} parent=1 // pred_fallthru
      _
    // Predicated region
    $region30: #{tpu_custom_call.1} parent=1 // pred_check
      _
    $region31: #{tpu_custom_call.1} parent=1 // pred_check_branch
      %30 = sbr.rel (0) target = $region33
    $region32: #{tpu_custom_call.1} parent=1 // pred_region
      _
    $region33: #{tpu_custom_call.1} parent=1 // pred_fallthru
      _
    // Predicated region
    $region34: #{tpu_custom_call.1} parent=1 // pred_check
      _
    $region35: #{tpu_custom_call.1} parent=1 // pred_check_branch
      %32 = sbr.rel (0) target = $region37
    $region36: #{tpu_custom_call.1} parent=1 // pred_region
      _
    $region37: #{tpu_custom_call.1} parent=1 // pred_fallthru
      _
    %v33 = vld [vmem:[%s0] sm:$0xff]
    %v34 = vld [vmem:[%s1] sm:$0xff]
    %v35 = vld [vmem:[%s1 + $0x8] sm:$0xff]
    %v36 = vld [vmem:[%s1 + $0x10] sm:$0xff]
    %v37 = vld [vmem:[%s1 + $0x18] sm:$0xff]
    %v38 = vld [vmem:[%s1 + $0x20] sm:$0xff]
    %v39 = vld [vmem:[%s1 + $0x28] sm:$0xff]
    %v40 = vld [vmem:[%s1 + $0x30] sm:$0xff]
    %v41 = vld [vmem:[%s1 + $0x38] sm:$0xff]
    %v42 = vld [vmem:[%s2] sm:$0x1]
    %v44 = vlaneseq
    %v45 = vshrl.u32 %v44, 7
    %v46 = vsub.s32 0, %v45
    %v47 = vrot.slane %v42, %v46
    %vm49 = vcmask 523264
    %v51 = vsel %vm49, %v33, 0
    %53 = vmatprep.subr.mxu0 0.0
    %54 = vmatpush1.msra.mxu0 %v34
    %55 = vmatprep.subr.mxu0 0.0
    %56 = vmatpush1.msra.mxu0 %v35
    %57 = vmatprep.subr.mxu0 0.0
    %58 = vmatpush1.msra.mxu0 %v36
    %59 = vmatprep.subr.mxu0 0.0
    %60 = vmatpush1.msra.mxu0 %v37
    %61 = vmatprep.subr.mxu0 0.0
    %62 = vmatpush1.msra.mxu0 %v38
    %63 = vmatprep.subr.mxu0 0.0
    %64 = vmatpush1.msra.mxu0 %v39
    %65 = vmatprep.subr.mxu0 0.0
    %66 = vmatpush1.msra.mxu0 %v40
    %67 = vmatprep.subr.mxu0 0.0
    %68 = vmatpush1.msra.mxu0 %v41
    %69 = vmatprep.subr.mxu0 0.0
    %70 = vmatpush1.msra.mxu0 0.0
    %71 = vmatprep.subr.mxu0 0.0
    %72 = vmatpush1.msra.mxu0 0.0
    %73 = vmatprep.subr.mxu0 0.0
    %74 = vmatpush1.msra.mxu0 0.0
    %75 = vmatprep.subr.mxu0 0.0
    %76 = vmatpush1.msra.mxu0 0.0
    %77 = vmatprep.subr.mxu0 0.0
    %78 = vmatpush1.msra.mxu0 0.0
    %79 = vmatprep.subr.mxu0 0.0
    %80 = vmatpush1.msra.mxu0 0.0
    %81 = vmatprep.subr.mxu0 0.0
    %82 = vmatpush1.msra.mxu0 0.0
    %83 = vmatprep.subr.mxu0 0.0
    %84 = vmatpush1.msra.mxu0 0.0
    %85 = vmatprep.subr.mxu0 0.0
    %86 = vmatpush1.msra.mxu0 0.0
    %87 = vmatprep.subr.mxu0 0.0
    %88 = vmatpush1.msra.mxu0 0.0
    %89 = vmatprep.subr.mxu0 0.0
    %90 = vmatpush1.msra.mxu0 0.0
    %91 = vmatprep.subr.mxu0 0.0
    %92 = vmatpush1.msra.mxu0 0.0
    %93 = vmatprep.subr.mxu0 0.0
    %94 = vmatpush1.msra.mxu0 0.0
    %95 = vmatprep.subr.mxu0 0.0
    %96 = vmatpush1.msra.mxu0 0.0
    %97 = vmatprep.subr.mxu0 0.0
    %98 = vmatpush1.msra.mxu0 0.0
    %99 = vmatprep.subr.mxu0 0.0
    %100 = vmatpush1.msra.mxu0 0.0
    %101 = vmatprep.subr.mxu0 0.0
    %102 = vmatpush1.msra.mxu0 0.0
    %103 = vmatprep.subr.mxu0 0.0
    %104 = vmatpush1.msra.mxu0 0.0
    %105 = vmatprep.subr.mxu0 0.0
    %106 = vmatpush1.msra.mxu0 0.0
    %107 = vmatprep.subr.mxu0 0.0
    %108 = vmatpush1.msra.mxu0 0.0
    %109 = vmatprep.subr.mxu0 0.0
    %110 = vmatpush1.msra.mxu0 0.0
    %111 = vmatprep.subr.mxu0 0.0
    %112 = vmatpush1.msra.mxu0 0.0
    %113 = vmatprep.subr.mxu0 0.0
    %114 = vmatpush1.msra.mxu0 0.0
    %115 = vmatprep.subr.mxu0 0.0
    %116 = vmatpush1.msra.mxu0 0.0
    %117 = vmatprep.mubr.f32.mxu0 0.0
    %118 = vmatmul.mubr.f32.gmra.mrb[0].mxu0 %v51
    %v119 = vpop.f32.mrb[0].mxu0
    %v120 = vadd.f32 %v47, %v119
    %v121 = vpop.f32.mrb[0].mxu0
    %122 = vdwg.mxu0
    %v123 = vmax.f32 %v120, 0.0
    %v124 = vld [vmem:[%s3] sm:$0xff]
    %v125 = vld [vmem:[%s3 + $0x8] sm:$0xff]
    %v126 = vld [vmem:[%s3 + $0x10] sm:$0xff]
    %v127 = vld [vmem:[%s3 + $0x18] sm:$0xff]
    %v128 = vld [vmem:[%s4] sm:$0x1]
    %v130 = vlaneseq
    %v131 = vshrl.u32 %v130, 7
    %v132 = vsub.s32 0, %v131
    %v133 = vrot.slane %v128, %v132
    %vm135 = vcmask 261120
    %v137 = vsel %vm135, %v123, 0
    %139 = vmatprep.subr.mxu0 0.0
    %140 = vmatpush1.msra.mxu0 %v124
    %141 = vmatprep.subr.mxu0 0.0
    %142 = vmatpush1.msra.mxu0 %v125
    %143 = vmatprep.subr.mxu0 0.0
    %144 = vmatpush1.msra.mxu0 %v126
    %145 = vmatprep.subr.mxu0 0.0
    %146 = vmatpush1.msra.mxu0 %v127
    %147 = vmatprep.subr.mxu0 0.0
    %148 = vmatpush1.msra.mxu0 0.0
    %149 = vmatprep.subr.mxu0 0.0
    %150 = vmatpush1.msra.mxu0 0.0
    %151 = vmatprep.subr.mxu0 0.0
    %152 = vmatpush1.msra.mxu0 0.0
    %153 = vmatprep.subr.mxu0 0.0
    %154 = vmatpush1.msra.mxu0 0.0
    %155 = vmatprep.subr.mxu0 0.0
    %156 = vmatpush1.msra.mxu0 0.0
    %157 = vmatprep.subr.mxu0 0.0
    %158 = vmatpush1.msra.mxu0 0.0
    %159 = vmatprep.subr.mxu0 0.0
    %160 = vmatpush1.msra.mxu0 0.0
    %161 = vmatprep.subr.mxu0 0.0
    %162 = vmatpush1.msra.mxu0 0.0
    %163 = vmatprep.subr.mxu0 0.0
    %164 = vmatpush1.msra.mxu0 0.0
    %165 = vmatprep.subr.mxu0 0.0
    %166 = vmatpush1.msra.mxu0 0.0
    %167 = vmatprep.subr.mxu0 0.0
    %168 = vmatpush1.msra.mxu0 0.0
    %169 = vmatprep.subr.mxu0 0.0
    %170 = vmatpush1.msra.mxu0 0.0
    %171 = vmatprep.subr.mxu0 0.0
    %172 = vmatpush1.msra.mxu0 0.0
    %173 = vmatprep.subr.mxu0 0.0
    %174 = vmatpush1.msra.mxu0 0.0
    %175 = vmatprep.subr.mxu0 0.0
    %176 = vmatpush1.msra.mxu0 0.0
    %177 = vmatprep.subr.mxu0 0.0
    %178 = vmatpush1.msra.mxu0 0.0
    %179 = vmatprep.subr.mxu0 0.0
    %180 = vmatpush1.msra.mxu0 0.0
    %181 = vmatprep.subr.mxu0 0.0
    %182 = vmatpush1.msra.mxu0 0.0
    %183 = vmatprep.subr.mxu0 0.0
    %184 = vmatpush1.msra.mxu0 0.0
    %185 = vmatprep.subr.mxu0 0.0
    %186 = vmatpush1.msra.mxu0 0.0
    %187 = vmatprep.subr.mxu0 0.0
    %188 = vmatpush1.msra.mxu0 0.0
    %189 = vmatprep.subr.mxu0 0.0
    %190 = vmatpush1.msra.mxu0 0.0
    %191 = vmatprep.subr.mxu0 0.0
    %192 = vmatpush1.msra.mxu0 0.0
    %193 = vmatprep.subr.mxu0 0.0
    %194 = vmatpush1.msra.mxu0 0.0
    %195 = vmatprep.subr.mxu0 0.0
    %196 = vmatpush1.msra.mxu0 0.0
    %197 = vmatprep.subr.mxu0 0.0
    %198 = vmatpush1.msra.mxu0 0.0
    %199 = vmatprep.subr.mxu0 0.0
    %200 = vmatpush1.msra.mxu0 0.0
    %201 = vmatprep.subr.mxu0 0.0
    %202 = vmatpush1.msra.mxu0 0.0
    %203 = vmatprep.mubr.f32.mxu0 0.0
    %204 = vmatmul.mubr.f32.gmra.mrb[0].mxu0 %v137
    %v205 = vpop.f32.mrb[0].mxu0
    %v206 = vadd.f32 %v133, %v205
    %v207 = vpop.f32.mrb[0].mxu0
    %208 = vdwg.mxu0
    %v209 = vld [vmem:[%s5] sm:$0xff]
    %v210 = vld [vmem:[%s5 + $0x8] sm:$0xff]
    %v211 = vld [vmem:[%s6] sm:$0x1]
    %v213 = vlaneseq
    %v214 = vshrl.u32 %v213, 7
    %v215 = vsub.s32 0, %v214
    %v216 = vrot.slane %v211, %v215
    %vm218 = vcmask 130048
    %v220 = vsel %vm218, %v206, 0
    %222 = vmatprep.subr.mxu0 0.0
    %223 = vmatpush1.msra.mxu0 %v209
    %224 = vmatprep.subr.mxu0 0.0
    %225 = vmatpush1.msra.mxu0 %v210
    %226 = vmatprep.subr.mxu0 0.0
    %227 = vmatpush1.msra.mxu0 0.0
    %228 = vmatprep.subr.mxu0 0.0
    %229 = vmatpush1.msra.mxu0 0.0
    %230 = vmatprep.subr.mxu0 0.0
    %231 = vmatpush1.msra.mxu0 0.0
    %232 = vmatprep.subr.mxu0 0.0
    %233 = vmatpush1.msra.mxu0 0.0
    %234 = vmatprep.subr.mxu0 0.0
    %235 = vmatpush1.msra.mxu0 0.0
    %236 = vmatprep.subr.mxu0 0.0
    %237 = vmatpush1.msra.mxu0 0.0
    %238 = vmatprep.subr.mxu0 0.0
    %239 = vmatpush1.msra.mxu0 0.0
    %240 = vmatprep.subr.mxu0 0.0
    %241 = vmatpush1.msra.mxu0 0.0
    %242 = vmatprep.subr.mxu0 0.0
    %243 = vmatpush1.msra.mxu0 0.0
    %244 = vmatprep.subr.mxu0 0.0
    %245 = vmatpush1.msra.mxu0 0.0
    %246 = vmatprep.subr.mxu0 0.0
    %247 = vmatpush1.msra.mxu0 0.0
    %248 = vmatprep.subr.mxu0 0.0
    %249 = vmatpush1.msra.mxu0 0.0
    %250 = vmatprep.subr.mxu0 0.0
    %251 = vmatpush1.msra.mxu0 0.0
    %252 = vmatprep.subr.mxu0 0.0
    %253 = vmatpush1.msra.mxu0 0.0
    %254 = vmatprep.subr.mxu0 0.0
    %255 = vmatpush1.msra.mxu0 0.0
    %256 = vmatprep.subr.mxu0 0.0
    %257 = vmatpush1.msra.mxu0 0.0
    %258 = vmatprep.subr.mxu0 0.0
    %259 = vmatpush1.msra.mxu0 0.0
    %260 = vmatprep.subr.mxu0 0.0
    %261 = vmatpush1.msra.mxu0 0.0
    %262 = vmatprep.subr.mxu0 0.0
    %263 = vmatpush1.msra.mxu0 0.0
    %264 = vmatprep.subr.mxu0 0.0
    %265 = vmatpush1.msra.mxu0 0.0
    %266 = vmatprep.subr.mxu0 0.0
    %267 = vmatpush1.msra.mxu0 0.0
    %268 = vmatprep.subr.mxu0 0.0
    %269 = vmatpush1.msra.mxu0 0.0
    %270 = vmatprep.subr.mxu0 0.0
    %271 = vmatpush1.msra.mxu0 0.0
    %272 = vmatprep.subr.mxu0 0.0
    %273 = vmatpush1.msra.mxu0 0.0
    %274 = vmatprep.subr.mxu0 0.0
    %275 = vmatpush1.msra.mxu0 0.0
    %276 = vmatprep.subr.mxu0 0.0
    %277 = vmatpush1.msra.mxu0 0.0
    %278 = vmatprep.subr.mxu0 0.0
    %279 = vmatpush1.msra.mxu0 0.0
    %280 = vmatprep.subr.mxu0 0.0
    %281 = vmatpush1.msra.mxu0 0.0
    %282 = vmatprep.subr.mxu0 0.0
    %283 = vmatpush1.msra.mxu0 0.0
    %284 = vmatprep.subr.mxu0 0.0
    %285 = vmatpush1.msra.mxu0 0.0
    %286 = vmatprep.mubr.f32.mxu0 0.0
    %287 = vmatmul.mubr.f32.gmra.mrb[0].mxu0 %v220
    %v288 = vpop.f32.mrb[0].mxu0
    %v289 = vadd.f32 %v216, %v288
    %v290 = vpop.f32.mrb[0].mxu0
    %291 = vdwg.mxu0
    %v292 = vmax.f32 %v289, 0.0
    %v293 = vld [vmem:[%s7] sm:$0xff]
    %v294 = vld [vmem:[%s7 + $0x8] sm:$0xff]
    %v295 = vld [vmem:[%s7 + $0x10] sm:$0xff]
    %v296 = vld [vmem:[%s7 + $0x18] sm:$0xff]
    %v297 = vld [vmem:[%s8] sm:$0x1]
    %v299 = vlaneseq
    %v300 = vshrl.u32 %v299, 7
    %v301 = vsub.s32 0, %v300
    %v302 = vrot.slane %v297, %v301
    %v305 = vsel %vm135, %v292, 0
    %307 = vmatprep.subr.mxu0 0.0
    %308 = vmatpush1.msra.mxu0 %v293
    %309 = vmatprep.subr.mxu0 0.0
    %310 = vmatpush1.msra.mxu0 %v294
    %311 = vmatprep.subr.mxu0 0.0
    %312 = vmatpush1.msra.mxu0 %v295
    %313 = vmatprep.subr.mxu0 0.0
    %314 = vmatpush1.msra.mxu0 %v296
    %315 = vmatprep.subr.mxu0 0.0
    %316 = vmatpush1.msra.mxu0 0.0
    %317 = vmatprep.subr.mxu0 0.0
    %318 = vmatpush1.msra.mxu0 0.0
    %319 = vmatprep.subr.mxu0 0.0
    %320 = vmatpush1.msra.mxu0 0.0
    %321 = vmatprep.subr.mxu0 0.0
    %322 = vmatpush1.msra.mxu0 0.0
    %323 = vmatprep.subr.mxu0 0.0
    %324 = vmatpush1.msra.mxu0 0.0
    %325 = vmatprep.subr.mxu0 0.0
    %326 = vmatpush1.msra.mxu0 0.0
    %327 = vmatprep.subr.mxu0 0.0
    %328 = vmatpush1.msra.mxu0 0.0
    %329 = vmatprep.subr.mxu0 0.0
    %330 = vmatpush1.msra.mxu0 0.0
    %331 = vmatprep.subr.mxu0 0.0
    %332 = vmatpush1.msra.mxu0 0.0
    %333 = vmatprep.subr.mxu0 0.0
    %334 = vmatpush1.msra.mxu0 0.0
    %335 = vmatprep.subr.mxu0 0.0
    %336 = vmatpush1.msra.mxu0 0.0
    %337 = vmatprep.subr.mxu0 0.0
    %338 = vmatpush1.msra.mxu0 0.0
    %339 = vmatprep.subr.mxu0 0.0
    %340 = vmatpush1.msra.mxu0 0.0
    %341 = vmatprep.subr.mxu0 0.0
    %342 = vmatpush1.msra.mxu0 0.0
    %343 = vmatprep.subr.mxu0 0.0
    %344 = vmatpush1.msra.mxu0 0.0
    %345 = vmatprep.subr.mxu0 0.0
    %346 = vmatpush1.msra.mxu0 0.0
    %347 = vmatprep.subr.mxu0 0.0
    %348 = vmatpush1.msra.mxu0 0.0
    %349 = vmatprep.subr.mxu0 0.0
    %350 = vmatpush1.msra.mxu0 0.0
    %351 = vmatprep.subr.mxu0 0.0
    %352 = vmatpush1.msra.mxu0 0.0
    %353 = vmatprep.subr.mxu0 0.0
    %354 = vmatpush1.msra.mxu0 0.0
    %355 = vmatprep.subr.mxu0 0.0
    %356 = vmatpush1.msra.mxu0 0.0
    %357 = vmatprep.subr.mxu0 0.0
    %358 = vmatpush1.msra.mxu0 0.0
    %359 = vmatprep.subr.mxu0 0.0
    %360 = vmatpush1.msra.mxu0 0.0
    %361 = vmatprep.subr.mxu0 0.0
    %362 = vmatpush1.msra.mxu0 0.0
    %363 = vmatprep.subr.mxu0 0.0
    %364 = vmatpush1.msra.mxu0 0.0
    %365 = vmatprep.subr.mxu0 0.0
    %366 = vmatpush1.msra.mxu0 0.0
    %367 = vmatprep.subr.mxu0 0.0
    %368 = vmatpush1.msra.mxu0 0.0
    %369 = vmatprep.subr.mxu0 0.0
    %370 = vmatpush1.msra.mxu0 0.0
    %371 = vmatprep.mubr.f32.mxu0 0.0
    %372 = vmatmul.mubr.f32.gmra.mrb[0].mxu0 %v305
    %v373 = vpop.f32.mrb[0].mxu0
    %v374 = vadd.f32 %v302, %v373
    %v375 = vpop.f32.mrb[0].mxu0
    %376 = vdwg.mxu0
    %377 = vst.msk [vmem:[#allocation2] sm:$0xff] %vm49, %v374
    // Predicated region
    $region38: #{tpu_custom_call.1} parent=1 // pred_check
      _
    $region39: #{tpu_custom_call.1} parent=1 // pred_check_branch
      %379 = sbr.rel (0) target = $region41
    $region40: #{tpu_custom_call.1} parent=1 // pred_region
      %s381 = ssub.s32 128, 128
      %382 = vsyncadd [#allocation3], %s381
      %s384 = sshll.u32 [#allocation2], 4
      %s385 = int_to_ptr.vmem [resolvable:$true] %s384
      %387 = dma.vmem_to_hbm [thread:$0]  %s385, 128, %s9, [#allocation3]
    $region41: #{tpu_custom_call.1} parent=1 // pred_fallthru
      _
    // Predicated region
    $region42: #{tpu_custom_call.1} parent=1 // pred_check
      _
    $region43: #{tpu_custom_call.1} parent=1 // pred_check_branch
      %389 = sbr.rel (0) target = $region45
    $region44: #{tpu_custom_call.1} parent=1 // pred_region
      %390 = dma.done [#allocation3], 128
    $region45: #{tpu_custom_call.1} parent=1 // pred_fallthru
      _
    %391 = vsyncpa [#allocation3], 1

</llo_original>
